<compile_context>
chip_gen: v6e
topology: v6e:2x2x1
jax: 0.10.0
libtpu: 0.0.40
codegen_flags: <defaults>
</compile_context>

<pallas_src>
import math

import jax
import jax.numpy as jnp
import numpy as np
from jax.experimental import pallas as pl
from jax.experimental.pallas import tpu as pltpu


def _round_up(x: int, m: int) -> int:
    return ((x + m - 1) // m) * m


def _bernstein_kernel(pg_ref, d_ref, m1_ref, m2_ref, pref_ref, out_ref):
    # pg_ref   : (1, 1)            SMEM  (trainable pregamma scalar)
    # d_ref    : (block_rows, P)   VMEM  packed distances (P edges per row)
    # m1_ref   : (P, L)            VMEM  expand matrix scaled by exp1 (constant)
    # m2_ref   : (P, L)            VMEM  expand matrix scaled by exp2 (constant)
    # pref_ref : (1, L)            VMEM  binomial prefactor per lane  (constant)
    # out_ref  : (block_rows, L)   VMEM  lane-dense packed output (L = P * R)

    # softplus(pregamma), numerically stable (scalar work)
    x = pg_ref[0, 0]
    gamma = jnp.maximum(x, 0.0) + jnp.log(1.0 + jnp.exp(-jnp.abs(x)))

    # Per-edge log terms: log(exp_d) is -gamma*d exactly (no log needed).
    neg_gd = (-gamma) * d_ref[...]                 # (rows, P)
    exp_d = jnp.exp(neg_gd)                        # 1 exp per edge (EUP)
    one_m = jnp.maximum(1.0 - exp_d, 0.0)
    # Clamp -inf (d == 0) to a large finite negative so that lanes with
    # exp2 == 0 get 0 * (-1e30) = 0 -> exp(0) = 1   (matches 0**0 == 1)
    # and lanes with exp2 > 0 get exp(-huge) = 0    (matches 0**k  == 0).
    log1m = jnp.maximum(jnp.log(one_m), -1e30)     # 1 log per edge (EUP)

    # Expand (rows, P) -> (rows, L) and fold the integer exponents in, on the
    # otherwise idle MXU:
    #   log_out[r, l] = exp1[l % R] * neg_gd[r, l // R]
    #                 + exp2[l % R] * log1m[r, l // R]
    prec = jax.lax.Precision.HIGHEST               # keep full f32 accuracy
    log_out = jnp.dot(neg_gd, m1_ref[...],
                      precision=prec, preferred_element_type=jnp.float32)
    log_out = log_out + jnp.dot(log1m, m2_ref[...],
                                precision=prec,
                                preferred_element_type=jnp.float32)

    # One full-width exp per output element; single lane-dense store.
    out_ref[...] = pref_ref[...] * jnp.exp(log_out)


def bernstein_basis_pallas(d_scaled, pregamma, prefactor, exp1, exp2,
                           *, tile_rows: int = 2048):
    """d_scaled: (N,) float32 -> (N, num_radial) float32.

    prefactor / exp1 / exp2 are fixed (non-trainable) buffers and must be
    concrete arrays; pregamma may be a traced scalar parameter.
    """
    N = int(d_scaled.shape[0])
    R = int(prefactor.shape[0])

    # Pack `pack` edges into the 128-lane axis (lane-dense stores).
    pack = 128 // R if (R <= 128 and 128 % R == 0) else 1
    lanes = pack * R

    # ---- host-side constants (built from the fixed module buffers) ----
    pref_np = np.asarray(jax.device_get(prefactor), dtype=np.float32).reshape(-1)
    e1_np = np.asarray(jax.device_get(exp1), dtype=np.float32).reshape(-1)
    e2_np = np.asarray(jax.device_get(exp2), dtype=np.float32).reshape(-1)

    lane_edge = np.repeat(np.arange(pack), R)                       # (lanes,)
    sel = (np.arange(pack)[:, None] == lane_edge[None, :]).astype(np.float32)
    m1 = jnp.asarray(sel * np.tile(e1_np, pack)[None, :])           # (pack, lanes)
    m2 = jnp.asarray(sel * np.tile(e2_np, pack)[None, :])           # (pack, lanes)
    pref_row = jnp.asarray(np.tile(pref_np, pack)[None, :])         # (1, lanes)

    # ---- pack/pad edges into (rows, pack); rows a multiple of the row tile ----
    n_rows = -(-N // pack)
    block_rows = min(int(tile_rows), _round_up(n_rows, 8))
    n_rows_pad = _round_up(n_rows, block_rows)
    n_pad = n_rows_pad * pack

    d = d_scaled.astype(jnp.float32).reshape(N)
    d = jnp.pad(d, (0, n_pad - N), constant_values=1.0)
    d2 = d.reshape(n_rows_pad, pack)

    pg = jnp.asarray(pregamma, jnp.float32).reshape(1, 1)

    grid = (n_rows_pad // block_rows,)

    out_packed = pl.pallas_call(
        _bernstein_kernel,
        out_shape=jax.ShapeDtypeStruct((n_rows_pad, lanes), jnp.float32),
        grid=grid,
        in_specs=[
            pl.BlockSpec(memory_space=pltpu.SMEM),               # pregamma (1,1)
            pl.BlockSpec((block_rows, pack), lambda i: (i, 0)),   # packed d
            pl.BlockSpec((pack, lanes), lambda i: (0, 0)),        # m1 (replicated)
            pl.BlockSpec((pack, lanes), lambda i: (0, 0)),        # m2 (replicated)
            pl.BlockSpec((1, lanes), lambda i: (0, 0)),           # prefactor row
        ],
        out_specs=pl.BlockSpec((block_rows, lanes), lambda i: (i, 0)),
        compiler_params=pltpu.CompilerParams(
            dimension_semantics=("parallel",),
        ),
    )(pg, d2, m1, m2, pref_row)

    # Row-major un-pack is layout-free; drop padded edges.
    return out_packed.reshape(n_pad, R)[:N]


def _reference(d_scaled, pregamma, prefactor, exp1, exp2):
    gamma = jax.nn.softplus(pregamma)
    exp_d = jnp.exp(-gamma * d_scaled)[:, None]
    return prefactor[None, :] * exp_d ** exp1[None, :] * (1.0 - exp_d) ** exp2[None, :]


if __name__ == "__main__":
    num_radial = 8
    pregamma_initial = 0.45264
    N = 200  # small; not a multiple of the 16-edge lane packing -> exercises padding

    # Deterministic parameter/buffer initialization (matches nn.Module __init__)
    prefactor = jnp.asarray(
        [math.comb(num_radial - 1, k) for k in range(num_radial)], dtype=jnp.float32
    )
    exp1 = jnp.arange(num_radial, dtype=jnp.float32)
    exp2 = (num_radial - 1) - exp1
    pregamma = jnp.float32(pregamma_initial)

    key = jax.random.PRNGKey(0)
    d_scaled = jax.random.uniform(key, (N,), dtype=jnp.float32) * 5.0
    d_scaled = d_scaled.at[0].set(0.0)  # include the d == 0 corner case (0**0 == 1)

    out = bernstein_basis_pallas(d_scaled, pregamma, prefactor, exp1, exp2)
    out = jax.block_until_ready(out)

    ref = _reference(d_scaled, pregamma, prefactor, exp1, exp2)
    np.testing.assert_allclose(np.asarray(out), np.asarray(ref), rtol=2e-4, atol=1e-6)
    assert out.shape == (N, num_radial)

    print("KERNEL_OK")
</pallas_src>

<mosaic_0001>
module attributes {stable_mosaic.version = 11 : i64} {
  func.func @_bernstein_kernel(%arg0: i32, %arg1: memref<1x1xf32, #tpu.memory_space<smem>>, %arg2: memref<16x16xf32, #tpu.memory_space<vmem>>, %arg3: memref<16x128xf32, #tpu.memory_space<vmem>>, %arg4: memref<16x128xf32, #tpu.memory_space<vmem>>, %arg5: memref<1x128xf32, #tpu.memory_space<vmem>>, %arg6: memref<16x128xf32, #tpu.memory_space<vmem>>) attributes {dimension_semantics = [#tpu.dimension_semantics<parallel>], iteration_bounds = array<i64: 1>, scalar_prefetch = 0 : i64, scratch_operands = 0 : i64, tpu.core_type = #tpu.core_type<tc>, window_params = [{transform_indices = @transform_0, window_bounds = array<i64: 1, 1>}, {transform_indices = @transform_1, window_bounds = array<i64: 16, 16>}, {pipeline_mode = #tpu.pipeline_mode<synchronous>, transform_indices = @transform_2, window_bounds = array<i64: 16, 128>}, {pipeline_mode = #tpu.pipeline_mode<synchronous>, transform_indices = @transform_3, window_bounds = array<i64: 16, 128>}, {pipeline_mode = #tpu.pipeline_mode<synchronous>, transform_indices = @transform_4, window_bounds = array<i64: 1, 128>}, {transform_indices = @transform_5, window_bounds = array<i64: 16, 128>}]} {
    %c0 = arith.constant 0 : index
    %c0_0 = arith.constant 0 : index
    %0 = memref.load %arg1[%c0, %c0_0] : memref<1x1xf32, #tpu.memory_space<smem>>
    %cst = arith.constant 0.000000e+00 : f32
    %1 = arith.maximumf %0, %cst : f32
    %2 = math.absf %0 : f32
    %cst_1 = arith.constant 0.000000e+00 : f32
    %3 = arith.subf %cst_1, %2 : f32
    %4 = math.exp %3 : f32
    %cst_2 = arith.constant 1.000000e+00 : f32
    %5 = arith.addf %cst_2, %4 : f32
    %6 = math.log %5 : f32
    %7 = arith.addf %1, %6 : f32
    %cst_3 = arith.constant 0.000000e+00 : f32
    %8 = arith.subf %cst_3, %7 : f32
    %c0_4 = arith.constant 0 : index
    %c0_5 = arith.constant 0 : index
    %9 = vector.load %arg2[%c0_4, %c0_5] : memref<16x16xf32, #tpu.memory_space<vmem>>, vector<16x16xf32>
    %10 = vector.broadcast %8 : f32 to vector<16x16xf32>
    %11 = arith.mulf %10, %9 : vector<16x16xf32>
    %12 = math.exp %11 : vector<16x16xf32>
    %cst_6 = arith.constant 1.000000e+00 : f32
    %13 = vector.broadcast %cst_6 : f32 to vector<16x16xf32>
    %14 = arith.subf %13, %12 : vector<16x16xf32>
    %cst_7 = arith.constant 0.000000e+00 : f32
    %15 = vector.broadcast %cst_7 : f32 to vector<16x16xf32>
    %16 = arith.maximumf %14, %15 : vector<16x16xf32>
    %17 = math.log %16 : vector<16x16xf32>
    %cst_8 = arith.constant -1.000000e+30 : f32
    %18 = vector.broadcast %cst_8 : f32 to vector<16x16xf32>
    %19 = arith.maximumf %17, %18 : vector<16x16xf32>
    %c0_9 = arith.constant 0 : index
    %c0_10 = arith.constant 0 : index
    %20 = vector.load %arg3[%c0_9, %c0_10] : memref<16x128xf32, #tpu.memory_space<vmem>>, vector<16x128xf32>
    %cst_11 = arith.constant dense<0.000000e+00> : vector<16x128xf32>
    %21 = tpu.matmul %11, %20, %cst_11 {dimension_numbers = #tpu.dot_dimension_numbers<[1], [0], [0], [1], [0, 0, 1, 1], [], []>, precision = #tpu.contract_precision<fp32>} : vector<16x16xf32>, vector<16x128xf32>, vector<16x128xf32> -> vector<16x128xf32>
    %c0_12 = arith.constant 0 : index
    %c0_13 = arith.constant 0 : index
    %22 = vector.load %arg4[%c0_12, %c0_13] : memref<16x128xf32, #tpu.memory_space<vmem>>, vector<16x128xf32>
    %cst_14 = arith.constant dense<0.000000e+00> : vector<16x128xf32>
    %23 = tpu.matmul %19, %22, %cst_14 {dimension_numbers = #tpu.dot_dimension_numbers<[1], [0], [0], [1], [0, 0, 1, 1], [], []>, precision = #tpu.contract_precision<fp32>} : vector<16x16xf32>, vector<16x128xf32>, vector<16x128xf32> -> vector<16x128xf32>
    %24 = arith.addf %21, %23 : vector<16x128xf32>
    %c0_15 = arith.constant 0 : index
    %c0_16 = arith.constant 0 : index
    %25 = vector.load %arg5[%c0_15, %c0_16] : memref<1x128xf32, #tpu.memory_space<vmem>>, vector<1x128xf32>
    %26 = math.exp %24 : vector<16x128xf32>
    %27 = vector.broadcast %25 : vector<1x128xf32> to vector<16x128xf32>
    %28 = arith.mulf %27, %26 : vector<16x128xf32>
    %c0_17 = arith.constant 0 : index
    %c0_18 = arith.constant 0 : index
    %29 = vector.load %arg6[%c0_17, %c0_18] : memref<16x128xf32, #tpu.memory_space<vmem>>, vector<16x128xf32>
    tpu.vector_store %arg6[%c0_17, %c0_18], %28 {strides = array<i32>} : memref<16x128xf32, #tpu.memory_space<vmem>>, vector<16x128xf32>,
    return
  }
  func.func @transform_0(%arg0: i32) -> (i32, i32) {
    %c0_i32 = arith.constant 0 : i32
    %c0_i32_0 = arith.constant 0 : i32
    %c0_i32_1 = arith.constant 0 : i32
    return %c0_i32, %c0_i32_0 : i32, i32
  }
  func.func @transform_1(%arg0: i32) -> (i32, i32) {
    %c0_i32 = arith.constant 0 : i32
    %c0_i32_0 = arith.constant 0 : i32
    return %arg0, %c0_i32 : i32, i32
  }
  func.func @transform_2(%arg0: i32) -> (i32, i32) {
    %c0_i32 = arith.constant 0 : i32
    %c0_i32_0 = arith.constant 0 : i32
    %c0_i32_1 = arith.constant 0 : i32
    return %c0_i32, %c0_i32_0 : i32, i32
  }
  func.func @transform_3(%arg0: i32) -> (i32, i32) {
    %c0_i32 = arith.constant 0 : i32
    %c0_i32_0 = arith.constant 0 : i32
    %c0_i32_1 = arith.constant 0 : i32
    return %c0_i32, %c0_i32_0 : i32, i32
  }
  func.func @transform_4(%arg0: i32) -> (i32, i32) {
    %c0_i32 = arith.constant 0 : i32
    %c0_i32_0 = arith.constant 0 : i32
    %c0_i32_1 = arith.constant 0 : i32
    return %c0_i32, %c0_i32_0 : i32, i32
  }
  func.func @transform_5(%arg0: i32) -> (i32, i32) {
    %c0_i32 = arith.constant 0 : i32
    %c0_i32_0 = arith.constant 0 : i32
    return %arg0, %c0_i32 : i32, i32
  }
}

</mosaic_0001>

<llo_original>
// kernel: tpu_custom_call.1
$region0: #{tpu_custom_call.1}
  #allocation0 [shape = 'u32[]', space=smem, size = 0x4, offset = 0x4, fixed_abs, tag = 'smem constant byte address 0x4 - core index']
  #allocation1 [shape = 'u32[144,128]{1,0:T(1,128)}', space=vmem, size = 0x12000, scoped, tag = 'internal scratch']
  #allocation2 [shape = 'f32[1,1]{1,0:T(1,128)S(6)}', space=smem, size = 0x200, scoped, tag = 'scoped memory for tpu_custom_call.1']
  %s0 = inlined_call_operand.<no memory space> [shape: f32[1,1], index: 0, kind: input, shape index: {}]
  %s1 = inlined_call_operand.hbm [shape: f32[16,16], index: 1, kind: input, shape index: {}]
  %s2 = inlined_call_operand.hbm [shape: f32[16,128], index: 2, kind: input, shape index: {}]
  %s3 = inlined_call_operand.hbm [shape: f32[16,128], index: 3, kind: input, shape index: {}]
  %s4 = inlined_call_operand.vmem [shape: f32[1,128], index: 4, kind: input, shape index: {}]
  %s5 = inlined_call_operand.hbm [shape: f32[16,128], index: 5, kind: output, shape index: {}]
  %s6 = sld [smem:[#allocation0]]
  $region42: #{tpu_custom_call.1} parent=0
    _
  %s8 = ssub.s32 1, %s6
  %s9 = scalar_select 0, %s8, %s6
  %10 = sst [smem:[#allocation2]] %s0
  $region1: #{tpu_custom_call.1} parent=0
    #allocation3 [shape = 'u8[8192]{0}', space=vmem, size = 0x2000, scoped, tag = 'input window, operand 1, single buffered']
    #allocation4 [shape = 's32[1]{0}', space=sflag, size = 0x4, scoped, tag = 'scoped memory for tpu_custom_call.1']
    #allocation5 [shape = 's32[1]{0}', space=sflag, size = 0x4, scoped, tag = 'scoped memory for tpu_custom_call.1']
    #allocation6 [shape = 'u8[8192]{0}', space=vmem, size = 0x2000, scoped, tag = 'input window, operand 2, single buffered']
    #allocation7 [shape = 's32[1]{0}', space=sflag, size = 0x4, scoped, tag = 'scoped memory for tpu_custom_call.1']
    #allocation8 [shape = 'u8[8192]{0}', space=vmem, size = 0x2000, scoped, tag = 'input window, operand 3, single buffered']
    #allocation9 [shape = 'u8[8192]{0}', space=vmem, size = 0x2000, scoped, tag = 'output window, operand 0, single buffered']
    %11 = vsyncpa [#allocation4], 0
    %12 = vsyncpa [#allocation7], 0
    %13 = vsyncpa [#allocation5], 0
    // Predicated region
    $region2: #{tpu_custom_call.1} parent=1 // pred_check
      _
    $region3: #{tpu_custom_call.1} parent=1 // pred_check_branch
      %15 = sbr.rel (0) target = $region5
    $region4: #{tpu_custom_call.1} parent=1 // pred_region
      _
    $region5: #{tpu_custom_call.1} parent=1 // pred_fallthru
      _
    // Predicated region
    $region6: #{tpu_custom_call.1} parent=1 // pred_check
      _
    $region7: #{tpu_custom_call.1} parent=1 // pred_check_branch
      %17 = sbr.rel (0) target = $region9
    $region8: #{tpu_custom_call.1} parent=1 // pred_region
      %s19 = ssub.s32 256, 256
      %20 = vsyncadd [#allocation4], %s19
      %s21 = sshll.u32 [#allocation3], 4
      %s22 = int_to_ptr.vmem [resolvable:$true] %s21
      %27 = dma.hbm_to_vmem [thread:$0]  %s1, 256, %s22, [#allocation4], 128, 128, 8
    $region9: #{tpu_custom_call.1} parent=1 // pred_fallthru
      _
    // Predicated region
    $region10: #{tpu_custom_call.1} parent=1 // pred_check
      _
    $region11: #{tpu_custom_call.1} parent=1 // pred_check_branch
      %29 = sbr.rel (0) target = $region13
    $region12: #{tpu_custom_call.1} parent=1 // pred_region
      %s31 = ssub.s32 256, 256
      %32 = vsyncadd [#allocation7], %s31
      %s33 = sshll.u32 [#allocation6], 4
      %s34 = int_to_ptr.vmem [resolvable:$true] %s33
      %39 = dma.hbm_to_vmem [thread:$0]  %s2, 256, %s34, [#allocation7], 128, 128, 8
    $region13: #{tpu_custom_call.1} parent=1 // pred_fallthru
      _
    // Predicated region
    $region14: #{tpu_custom_call.1} parent=1 // pred_check
      _
    $region15: #{tpu_custom_call.1} parent=1 // pred_check_branch
      %41 = sbr.rel (0) target = $region17
    $region16: #{tpu_custom_call.1} parent=1 // pred_region
      %s43 = ssub.s32 256, 256
      %44 = vsyncadd [#allocation7], %s43
      %s45 = sshll.u32 [#allocation8], 4
      %s46 = int_to_ptr.vmem [resolvable:$true] %s45
      %51 = dma.hbm_to_vmem [thread:$0]  %s3, 256, %s46, [#allocation7], 128, 128, 8
    $region17: #{tpu_custom_call.1} parent=1 // pred_fallthru
      _
    // Predicated region
    $region18: #{tpu_custom_call.1} parent=1 // pred_check
      _
    $region19: #{tpu_custom_call.1} parent=1 // pred_check_branch
      %53 = sbr.rel (0) target = $region21
    $region20: #{tpu_custom_call.1} parent=1 // pred_region
      _
    $region21: #{tpu_custom_call.1} parent=1 // pred_fallthru
      _
    // Predicated region
    $region22: #{tpu_custom_call.1} parent=1 // pred_check
      _
    $region23: #{tpu_custom_call.1} parent=1 // pred_check_branch
      %55 = sbr.rel (0) target = $region25
    $region24: #{tpu_custom_call.1} parent=1 // pred_region
      %56 = dma.done [#allocation4], 256
    $region25: #{tpu_custom_call.1} parent=1 // pred_fallthru
      _
    // Predicated region
    $region26: #{tpu_custom_call.1} parent=1 // pred_check
      _
    $region27: #{tpu_custom_call.1} parent=1 // pred_check_branch
      %58 = sbr.rel (0) target = $region29
    $region28: #{tpu_custom_call.1} parent=1 // pred_region
      %59 = dma.done [#allocation7], 256
    $region29: #{tpu_custom_call.1} parent=1 // pred_fallthru
      _
    // Predicated region
    $region30: #{tpu_custom_call.1} parent=1 // pred_check
      _
    $region31: #{tpu_custom_call.1} parent=1 // pred_check_branch
      %61 = sbr.rel (0) target = $region33
    $region32: #{tpu_custom_call.1} parent=1 // pred_region
      %62 = dma.done [#allocation7], 256
    $region33: #{tpu_custom_call.1} parent=1 // pred_fallthru
      _
    %s63 = sld [smem:[#allocation2]]
    %s64 = smax.f32 %s63, 0.0
    %s65 = sand.u32 2147483647, %s63
    %s66 = ssub.f32 0.0, %s65
    %v67 = vstv %s66
    %v68 = vmul.f32 %v67, 1.442695
    %v69 = vpow.pop %v68
    %s70 = vtos %v69
    %s71 = sadd.f32 %s70, 1.0
    %v72 = vstv %s71
    %v73 = vlog2.pop %v72
    %v74 = vmul.f32 %v73, 0.6931472
    %s75 = vtos %v74
    %s76 = sadd.f32 %s64, %s75
    %s77 = ssub.f32 0.0, %s76
    %v78 = vld [vmem:[#allocation3] sm:$0xff]
    %v79 = vld [vmem:[#allocation3 + $0x8] sm:$0xff]
    %v80 = vstv %s77
    %v81 = vmul.f32 %v80, %v78
    %v82 = vmul.f32 %v80, %v79
    %v83 = vmul.f32 %v81, 1.442695
    %v84 = vpow.pop %v83
    %v85 = vmul.f32 %v82, 1.442695
    %v86 = vpow.pop %v85
    %v87 = vsub.f32 1.0, %v84
    %v88 = vsub.f32 1.0, %v86
    %v89 = vmax.f32 %v87, 0.0
    %v90 = vmax.f32 %v88, 0.0
    %v91 = vlog2.pop %v89
    %v92 = vmul.f32 %v91, 0.6931472
    %v93 = vlog2.pop %v90
    %v94 = vmul.f32 %v93, 0.6931472
    %v95 = vmax.f32 %v92, -1e+30
    %v96 = vmax.f32 %v94, -1e+30
    %v97 = vld [vmem:[#allocation6] sm:$0xff]
    %v98 = vld [vmem:[#allocation6 + $0x8] sm:$0xff]
    %v99 = vld [vmem:[#allocation8] sm:$0xff]
    %v100 = vld [vmem:[#allocation8 + $0x8] sm:$0xff]
    %vm101 = vcmask 130048
    %v103 = vsel %vm101, %v95, 0
    %v106 = vsel %vm101, %v96, 0
    %108 = vmatprep.subr.mxu0 0.0
    %109 = vmatpush1.msra.mxu0 0.0
    %110 = vmatprep.subr.mxu0 0.0
    %111 = vmatpush1.msra.mxu0 0.0
    %112 = vmatprep.subr.mxu0 0.0
    %113 = vmatpush1.msra.mxu0 0.0
    %114 = vmatprep.subr.mxu0 0.0
    %115 = vmatpush1.msra.mxu0 0.0
    %116 = vmatprep.subr.mxu0 0.0
    %117 = vmatpush1.msra.mxu0 0.0
    %118 = vmatprep.subr.mxu0 0.0
    %119 = vmatpush1.msra.mxu0 0.0
    %120 = vmatprep.subr.mxu0 0.0
    %121 = vmatpush1.msra.mxu0 0.0
    %122 = vmatprep.subr.mxu0 0.0
    %123 = vmatpush1.msra.mxu0 0.0
    %124 = vmatprep.subr.mxu0 0.0
    %125 = vmatpush1.msra.mxu0 0.0
    %126 = vmatprep.subr.mxu0 0.0
    %127 = vmatpush1.msra.mxu0 0.0
    %128 = vmatprep.subr.mxu0 0.0
    %129 = vmatpush1.msra.mxu0 0.0
    %130 = vmatprep.subr.mxu0 0.0
    %131 = vmatpush1.msra.mxu0 0.0
    %132 = vmatprep.subr.mxu0 0.0
    %133 = vmatpush1.msra.mxu0 0.0
    %134 = vmatprep.subr.mxu0 0.0
    %135 = vmatpush1.msra.mxu0 0.0
    %136 = vmatprep.subr.mxu0 0.0
    %v137 = vand.u32 %v100, 4294901760
    %138 = vmatpush1.msra.mxu0 %v137
    %139 = vmatprep.subr.mxu0 0.0
    %v140 = vand.u32 %v99, 4294901760
    %141 = vmatpush1.msra.mxu0 %v140
    %142 = vmatprep.subr.mxu0 0.0
    %143 = vmatpush2.msra.mxu0 0.0
    %144 = vmatprep.subr.mxu0 0.0
    %145 = vmatpush2.msra.mxu0 0.0
    %146 = vmatprep.subr.mxu0 0.0
    %147 = vmatpush2.msra.mxu0 0.0
    %148 = vmatprep.subr.mxu0 0.0
    %149 = vmatpush2.msra.mxu0 0.0
    %150 = vmatprep.subr.mxu0 0.0
    %151 = vmatpush2.msra.mxu0 0.0
    %152 = vmatprep.subr.mxu0 0.0
    %153 = vmatpush2.msra.mxu0 0.0
    %154 = vmatprep.subr.mxu0 0.0
    %155 = vmatpush2.msra.mxu0 0.0
    %156 = vmatprep.subr.mxu0 0.0
    %157 = vmatpush2.msra.mxu0 0.0
    %158 = vmatprep.subr.mxu0 0.0
    %159 = vmatpush2.msra.mxu0 0.0
    %160 = vmatprep.subr.mxu0 0.0
    %161 = vmatpush2.msra.mxu0 0.0
    %162 = vmatprep.subr.mxu0 0.0
    %163 = vmatpush2.msra.mxu0 0.0
    %164 = vmatprep.subr.mxu0 0.0
    %165 = vmatpush2.msra.mxu0 0.0
    %166 = vmatprep.subr.mxu0 0.0
    %167 = vmatpush2.msra.mxu0 0.0
    %168 = vmatprep.subr.mxu0 0.0
    %169 = vmatpush2.msra.mxu0 0.0
    %170 = vmatprep.subr.mxu0 0.0
    %171 = vmatpush2.msra.mxu0 0.0
    %172 = vmatprep.subr.mxu0 0.0
    %173 = vmatpush2.msra.mxu0 0.0
    %174 = vmatprep.mubr.f32.mxu0 0.0
    %v175 = vand.u32 %v103, 4294901760
    %v176 = vsub.f32 %v103, %v175
    %v177 = vand.u32 %v176, 4294901760
    %v178 = vsub.f32 %v176, %v177
    %v179 = vand.u32 %v178, 4294901760
    %180 = vmatmul.mubr.f32.gmra.mxu0 %v179
    %v181 = vpop.f32.mrf.mxu0
    %v182 = vadd.f32 0.0, %v181
    %v183 = vpop.f32.mrf.mxu0
    %184 = vmatprep.mubr.f32.mxu0 0.0
    %v185 = vand.u32 %v106, 4294901760
    %v186 = vsub.f32 %v106, %v185
    %v187 = vand.u32 %v186, 4294901760
    %v188 = vsub.f32 %v186, %v187
    %v189 = vand.u32 %v188, 4294901760
    %190 = vmatmul.mubr.f32.gmra.mxu0 %v189
    %v191 = vpop.f32.mrf.mxu0
    %v192 = vadd.f32 0.0, %v191
    %v193 = vpop.f32.mrf.mxu0
    %194 = vdwg.mxu0
    %195 = vmatprep.subr.mxu0 0.0
    %196 = vmatpush1.msra.mxu0 0.0
    %197 = vmatprep.subr.mxu0 0.0
    %198 = vmatpush1.msra.mxu0 0.0
    %199 = vmatprep.subr.mxu0 0.0
    %200 = vmatpush1.msra.mxu0 0.0
    %201 = vmatprep.subr.mxu0 0.0
    %202 = vmatpush1.msra.mxu0 0.0
    %203 = vmatprep.subr.mxu0 0.0
    %204 = vmatpush1.msra.mxu0 0.0
    %205 = vmatprep.subr.mxu0 0.0
    %206 = vmatpush1.msra.mxu0 0.0
    %207 = vmatprep.subr.mxu0 0.0
    %208 = vmatpush1.msra.mxu0 0.0
    %209 = vmatprep.subr.mxu0 0.0
    %210 = vmatpush1.msra.mxu0 0.0
    %211 = vmatprep.subr.mxu0 0.0
    %212 = vmatpush1.msra.mxu0 0.0
    %213 = vmatprep.subr.mxu0 0.0
    %214 = vmatpush1.msra.mxu0 0.0
    %215 = vmatprep.subr.mxu0 0.0
    %216 = vmatpush1.msra.mxu0 0.0
    %217 = vmatprep.subr.mxu0 0.0
    %218 = vmatpush1.msra.mxu0 0.0
    %219 = vmatprep.subr.mxu0 0.0
    %220 = vmatpush1.msra.mxu0 0.0
    %221 = vmatprep.subr.mxu0 0.0
    %222 = vmatpush1.msra.mxu0 0.0
    %223 = vmatprep.subr.mxu0 0.0
    %v224 = vand.u32 %v100, 4294901760
    %v225 = vsub.f32 %v100, %v224
    %v226 = vand.u32 %v225, 4294901760
    %v227 = vsub.f32 %v225, %v226
    %v228 = vand.u32 %v227, 4294901760
    %229 = vmatpush1.msra.mxu0 %v228
    %230 = vmatprep.subr.mxu0 0.0
    %v231 = vand.u32 %v99, 4294901760
    %v232 = vsub.f32 %v99, %v231
    %v233 = vand.u32 %v232, 4294901760
    %v234 = vsub.f32 %v232, %v233
    %v235 = vand.u32 %v234, 4294901760
    %236 = vmatpush1.msra.mxu0 %v235
    %237 = vmatprep.subr.mxu0 0.0
    %238 = vmatpush2.msra.mxu0 0.0
    %239 = vmatprep.subr.mxu0 0.0
    %240 = vmatpush2.msra.mxu0 0.0
    %241 = vmatprep.subr.mxu0 0.0
    %242 = vmatpush2.msra.mxu0 0.0
    %243 = vmatprep.subr.mxu0 0.0
    %244 = vmatpush2.msra.mxu0 0.0
    %245 = vmatprep.subr.mxu0 0.0
    %246 = vmatpush2.msra.mxu0 0.0
    %247 = vmatprep.subr.mxu0 0.0
    %248 = vmatpush2.msra.mxu0 0.0
    %249 = vmatprep.subr.mxu0 0.0
    %250 = vmatpush2.msra.mxu0 0.0
    %251 = vmatprep.subr.mxu0 0.0
    %252 = vmatpush2.msra.mxu0 0.0
    %253 = vmatprep.subr.mxu0 0.0
    %254 = vmatpush2.msra.mxu0 0.0
    %255 = vmatprep.subr.mxu0 0.0
    %256 = vmatpush2.msra.mxu0 0.0
    %257 = vmatprep.subr.mxu0 0.0
    %258 = vmatpush2.msra.mxu0 0.0
    %259 = vmatprep.subr.mxu0 0.0
    %260 = vmatpush2.msra.mxu0 0.0
    %261 = vmatprep.subr.mxu0 0.0
    %262 = vmatpush2.msra.mxu0 0.0
    %263 = vmatprep.subr.mxu0 0.0
    %264 = vmatpush2.msra.mxu0 0.0
    %265 = vmatprep.subr.mxu0 0.0
    %266 = vmatpush2.msra.mxu0 0.0
    %267 = vmatprep.subr.mxu0 0.0
    %268 = vmatpush2.msra.mxu0 0.0
    %269 = vmatprep.mubr.f32.mxu0 0.0
    %v270 = vand.u32 %v103, 4294901760
    %271 = vmatmul.mubr.f32.gmra.mxu0 %v270
    %v272 = vpop.f32.mrf.mxu0
    %v273 = vadd.f32 %v182, %v272
    %v274 = vpop.f32.mrf.mxu0
    %275 = vmatprep.mubr.f32.mxu0 0.0
    %v276 = vand.u32 %v106, 4294901760
    %277 = vmatmul.mubr.f32.gmra.mxu0 %v276
    %v278 = vpop.f32.mrf.mxu0
    %v279 = vadd.f32 %v192, %v278
    %v280 = vpop.f32.mrf.mxu0
    %281 = vdwg.mxu0
    %282 = vmatprep.subr.mxu0 0.0
    %283 = vmatpush1.msra.mxu0 0.0
    %284 = vmatprep.subr.mxu0 0.0
    %285 = vmatpush1.msra.mxu0 0.0
    %286 = vmatprep.subr.mxu0 0.0
    %287 = vmatpush1.msra.mxu0 0.0
    %288 = vmatprep.subr.mxu0 0.0
    %289 = vmatpush1.msra.mxu0 0.0
    %290 = vmatprep.subr.mxu0 0.0
    %291 = vmatpush1.msra.mxu0 0.0
    %292 = vmatprep.subr.mxu0 0.0
    %293 = vmatpush1.msra.mxu0 0.0
    %294 = vmatprep.subr.mxu0 0.0
    %295 = vmatpush1.msra.mxu0 0.0
    %296 = vmatprep.subr.mxu0 0.0
    %297 = vmatpush1.msra.mxu0 0.0
    %298 = vmatprep.subr.mxu0 0.0
    %299 = vmatpush1.msra.mxu0 0.0
    %300 = vmatprep.subr.mxu0 0.0
    %301 = vmatpush1.msra.mxu0 0.0
    %302 = vmatprep.subr.mxu0 0.0
    %303 = vmatpush1.msra.mxu0 0.0
    %304 = vmatprep.subr.mxu0 0.0
    %305 = vmatpush1.msra.mxu0 0.0
    %306 = vmatprep.subr.mxu0 0.0
    %307 = vmatpush1.msra.mxu0 0.0
    %308 = vmatprep.subr.mxu0 0.0
    %309 = vmatpush1.msra.mxu0 0.0
    %310 = vmatprep.subr.mxu0 0.0
    %v311 = vand.u32 %v100, 4294901760
    %v312 = vsub.f32 %v100, %v311
    %313 = vmatpush1.msra.mxu0 %v312
    %314 = vmatprep.subr.mxu0 0.0
    %v315 = vand.u32 %v99, 4294901760
    %v316 = vsub.f32 %v99, %v315
    %317 = vmatpush1.msra.mxu0 %v316
    %318 = vmatprep.subr.mxu0 0.0
    %319 = vmatpush2.msra.mxu0 0.0
    %320 = vmatprep.subr.mxu0 0.0
    %321 = vmatpush2.msra.mxu0 0.0
    %322 = vmatprep.subr.mxu0 0.0
    %323 = vmatpush2.msra.mxu0 0.0
    %324 = vmatprep.subr.mxu0 0.0
    %325 = vmatpush2.msra.mxu0 0.0
    %326 = vmatprep.subr.mxu0 0.0
    %327 = vmatpush2.msra.mxu0 0.0
    %328 = vmatprep.subr.mxu0 0.0
    %329 = vmatpush2.msra.mxu0 0.0
    %330 = vmatprep.subr.mxu0 0.0
    %331 = vmatpush2.msra.mxu0 0.0
    %332 = vmatprep.subr.mxu0 0.0
    %333 = vmatpush2.msra.mxu0 0.0
    %334 = vmatprep.subr.mxu0 0.0
    %335 = vmatpush2.msra.mxu0 0.0
    %336 = vmatprep.subr.mxu0 0.0
    %337 = vmatpush2.msra.mxu0 0.0
    %338 = vmatprep.subr.mxu0 0.0
    %339 = vmatpush2.msra.mxu0 0.0
    %340 = vmatprep.subr.mxu0 0.0
    %341 = vmatpush2.msra.mxu0 0.0
    %342 = vmatprep.subr.mxu0 0.0
    %343 = vmatpush2.msra.mxu0 0.0
    %344 = vmatprep.subr.mxu0 0.0
    %345 = vmatpush2.msra.mxu0 0.0
    %346 = vmatprep.subr.mxu0 0.0
    %347 = vmatpush2.msra.mxu0 0.0
    %348 = vmatprep.subr.mxu0 0.0
    %349 = vmatpush2.msra.mxu0 0.0
    %350 = vmatprep.mubr.f32.mxu0 0.0
    %v351 = vand.u32 %v103, 4294901760
    %v352 = vsub.f32 %v103, %v351
    %353 = vmatmul.mubr.f32.gmra.mxu0 %v352
    %v354 = vpop.f32.mrf.mxu0
    %v355 = vadd.f32 %v273, %v354
    %v356 = vpop.f32.mrf.mxu0
    %357 = vmatprep.mubr.f32.mxu0 0.0
    %v358 = vand.u32 %v106, 4294901760
    %v359 = vsub.f32 %v106, %v358
    %360 = vmatmul.mubr.f32.gmra.mxu0 %v359
    %v361 = vpop.f32.mrf.mxu0
    %v362 = vadd.f32 %v279, %v361
    %v363 = vpop.f32.mrf.mxu0
    %364 = vdwg.mxu0
    %365 = vmatprep.subr.mxu0 0.0
    %366 = vmatpush1.msra.mxu0 0.0
    %367 = vmatprep.subr.mxu0 0.0
    %368 = vmatpush1.msra.mxu0 0.0
    %369 = vmatprep.subr.mxu0 0.0
    %370 = vmatpush1.msra.mxu0 0.0
    %371 = vmatprep.subr.mxu0 0.0
    %372 = vmatpush1.msra.mxu0 0.0
    %373 = vmatprep.subr.mxu0 0.0
    %374 = vmatpush1.msra.mxu0 0.0
    %375 = vmatprep.subr.mxu0 0.0
    %376 = vmatpush1.msra.mxu0 0.0
    %377 = vmatprep.subr.mxu0 0.0
    %378 = vmatpush1.msra.mxu0 0.0
    %379 = vmatprep.subr.mxu0 0.0
    %380 = vmatpush1.msra.mxu0 0.0
    %381 = vmatprep.subr.mxu0 0.0
    %382 = vmatpush1.msra.mxu0 0.0
    %383 = vmatprep.subr.mxu0 0.0
    %384 = vmatpush1.msra.mxu0 0.0
    %385 = vmatprep.subr.mxu0 0.0
    %386 = vmatpush1.msra.mxu0 0.0
    %387 = vmatprep.subr.mxu0 0.0
    %388 = vmatpush1.msra.mxu0 0.0
    %389 = vmatprep.subr.mxu0 0.0
    %390 = vmatpush1.msra.mxu0 0.0
    %391 = vmatprep.subr.mxu0 0.0
    %392 = vmatpush1.msra.mxu0 0.0
    %393 = vmatprep.subr.mxu0 0.0
    %v394 = vand.u32 %v100, 4294901760
    %395 = vmatpush1.msra.mxu0 %v394
    %396 = vmatprep.subr.mxu0 0.0
    %v397 = vand.u32 %v99, 4294901760
    %398 = vmatpush1.msra.mxu0 %v397
    %399 = vmatprep.subr.mxu0 0.0
    %400 = vmatpush2.msra.mxu0 0.0
    %401 = vmatprep.subr.mxu0 0.0
    %402 = vmatpush2.msra.mxu0 0.0
    %403 = vmatprep.subr.mxu0 0.0
    %404 = vmatpush2.msra.mxu0 0.0
    %405 = vmatprep.subr.mxu0 0.0
    %406 = vmatpush2.msra.mxu0 0.0
    %407 = vmatprep.subr.mxu0 0.0
    %408 = vmatpush2.msra.mxu0 0.0
    %409 = vmatprep.subr.mxu0 0.0
    %410 = vmatpush2.msra.mxu0 0.0
    %411 = vmatprep.subr.mxu0 0.0
    %412 = vmatpush2.msra.mxu0 0.0
    %413 = vmatprep.subr.mxu0 0.0
    %414 = vmatpush2.msra.mxu0 0.0
    %415 = vmatprep.subr.mxu0 0.0
    %416 = vmatpush2.msra.mxu0 0.0
    %417 = vmatprep.subr.mxu0 0.0
    %418 = vmatpush2.msra.mxu0 0.0
    %419 = vmatprep.subr.mxu0 0.0
    %420 = vmatpush2.msra.mxu0 0.0
    %421 = vmatprep.subr.mxu0 0.0
    %422 = vmatpush2.msra.mxu0 0.0
    %423 = vmatprep.subr.mxu0 0.0
    %424 = vmatpush2.msra.mxu0 0.0
    %425 = vmatprep.subr.mxu0 0.0
    %426 = vmatpush2.msra.mxu0 0.0
    %427 = vmatprep.subr.mxu0 0.0
    %428 = vmatpush2.msra.mxu0 0.0
    %429 = vmatprep.subr.mxu0 0.0
    %430 = vmatpush2.msra.mxu0 0.0
    %431 = vmatprep.mubr.f32.mxu0 0.0
    %v432 = vand.u32 %v103, 4294901760
    %v433 = vsub.f32 %v103, %v432
    %v434 = vand.u32 %v433, 4294901760
    %435 = vmatmul.mubr.f32.gmra.mxu0 %v434
    %v436 = vpop.f32.mrf.mxu0
    %v437 = vadd.f32 %v355, %v436
    %v438 = vpop.f32.mrf.mxu0
    %439 = vmatprep.mubr.f32.mxu0 0.0
    %v440 = vand.u32 %v106, 4294901760
    %v441 = vsub.f32 %v106, %v440
    %v442 = vand.u32 %v441, 4294901760
    %443 = vmatmul.mubr.f32.gmra.mxu0 %v442
    %v444 = vpop.f32.mrf.mxu0
    %v445 = vadd.f32 %v362, %v444
    %v446 = vpop.f32.mrf.mxu0
    %447 = vdwg.mxu0
    %448 = vmatprep.subr.mxu0 0.0
    %449 = vmatpush1.msra.mxu0 0.0
    %450 = vmatprep.subr.mxu0 0.0
    %451 = vmatpush1.msra.mxu0 0.0
    %452 = vmatprep.subr.mxu0 0.0
    %453 = vmatpush1.msra.mxu0 0.0
    %454 = vmatprep.subr.mxu0 0.0
    %455 = vmatpush1.msra.mxu0 0.0
    %456 = vmatprep.subr.mxu0 0.0
    %457 = vmatpush1.msra.mxu0 0.0
    %458 = vmatprep.subr.mxu0 0.0
    %459 = vmatpush1.msra.mxu0 0.0
    %460 = vmatprep.subr.mxu0 0.0
    %461 = vmatpush1.msra.mxu0 0.0
    %462 = vmatprep.subr.mxu0 0.0
    %463 = vmatpush1.msra.mxu0 0.0
    %464 = vmatprep.subr.mxu0 0.0
    %465 = vmatpush1.msra.mxu0 0.0
    %466 = vmatprep.subr.mxu0 0.0
    %467 = vmatpush1.msra.mxu0 0.0
    %468 = vmatprep.subr.mxu0 0.0
    %469 = vmatpush1.msra.mxu0 0.0
    %470 = vmatprep.subr.mxu0 0.0
    %471 = vmatpush1.msra.mxu0 0.0
    %472 = vmatprep.subr.mxu0 0.0
    %473 = vmatpush1.msra.mxu0 0.0
    %474 = vmatprep.subr.mxu0 0.0
    %475 = vmatpush1.msra.mxu0 0.0
    %476 = vmatprep.subr.mxu0 0.0
    %v477 = vand.u32 %v100, 4294901760
    %v478 = vsub.f32 %v100, %v477
    %v479 = vand.u32 %v478, 4294901760
    %480 = vmatpush1.msra.mxu0 %v479
    %481 = vmatprep.subr.mxu0 0.0
    %v482 = vand.u32 %v99, 4294901760
    %v483 = vsub.f32 %v99, %v482
    %v484 = vand.u32 %v483, 4294901760
    %485 = vmatpush1.msra.mxu0 %v484
    %486 = vmatprep.subr.mxu0 0.0
    %487 = vmatpush2.msra.mxu0 0.0
    %488 = vmatprep.subr.mxu0 0.0
    %489 = vmatpush2.msra.mxu0 0.0
    %490 = vmatprep.subr.mxu0 0.0
    %491 = vmatpush2.msra.mxu0 0.0
    %492 = vmatprep.subr.mxu0 0.0
    %493 = vmatpush2.msra.mxu0 0.0
    %494 = vmatprep.subr.mxu0 0.0
    %495 = vmatpush2.msra.mxu0 0.0
    %496 = vmatprep.subr.mxu0 0.0
    %497 = vmatpush2.msra.mxu0 0.0
    %498 = vmatprep.subr.mxu0 0.0
    %499 = vmatpush2.msra.mxu0 0.0
    %500 = vmatprep.subr.mxu0 0.0
    %501 = vmatpush2.msra.mxu0 0.0
    %502 = vmatprep.subr.mxu0 0.0
    %503 = vmatpush2.msra.mxu0 0.0
    %504 = vmatprep.subr.mxu0 0.0
    %505 = vmatpush2.msra.mxu0 0.0
    %506 = vmatprep.subr.mxu0 0.0
    %507 = vmatpush2.msra.mxu0 0.0
    %508 = vmatprep.subr.mxu0 0.0
    %509 = vmatpush2.msra.mxu0 0.0
    %510 = vmatprep.subr.mxu0 0.0
    %511 = vmatpush2.msra.mxu0 0.0
    %512 = vmatprep.subr.mxu0 0.0
    %513 = vmatpush2.msra.mxu0 0.0
    %514 = vmatprep.subr.mxu0 0.0
    %515 = vmatpush2.msra.mxu0 0.0
    %516 = vmatprep.subr.mxu0 0.0
    %517 = vmatpush2.msra.mxu0 0.0
    %518 = vmatprep.mubr.f32.mxu0 0.0
    %v519 = vand.u32 %v103, 4294901760
    %520 = vmatmul.mubr.f32.gmra.mxu0 %v519
    %v521 = vpop.f32.mrf.mxu0
    %v522 = vadd.f32 %v437, %v521
    %v523 = vpop.f32.mrf.mxu0
    %524 = vmatprep.mubr.f32.mxu0 0.0
    %v525 = vand.u32 %v106, 4294901760
    %526 = vmatmul.mubr.f32.gmra.mxu0 %v525
    %v527 = vpop.f32.mrf.mxu0
    %v528 = vadd.f32 %v445, %v527
    %v529 = vpop.f32.mrf.mxu0
    %530 = vdwg.mxu0
    %531 = vmatprep.subr.mxu0 0.0
    %532 = vmatpush1.msra.mxu0 0.0
    %533 = vmatprep.subr.mxu0 0.0
    %534 = vmatpush1.msra.mxu0 0.0
    %535 = vmatprep.subr.mxu0 0.0
    %536 = vmatpush1.msra.mxu0 0.0
    %537 = vmatprep.subr.mxu0 0.0
    %538 = vmatpush1.msra.mxu0 0.0
    %539 = vmatprep.subr.mxu0 0.0
    %540 = vmatpush1.msra.mxu0 0.0
    %541 = vmatprep.subr.mxu0 0.0
    %542 = vmatpush1.msra.mxu0 0.0
    %543 = vmatprep.subr.mxu0 0.0
    %544 = vmatpush1.msra.mxu0 0.0
    %545 = vmatprep.subr.mxu0 0.0
    %546 = vmatpush1.msra.mxu0 0.0
    %547 = vmatprep.subr.mxu0 0.0
    %548 = vmatpush1.msra.mxu0 0.0
    %549 = vmatprep.subr.mxu0 0.0
    %550 = vmatpush1.msra.mxu0 0.0
    %551 = vmatprep.subr.mxu0 0.0
    %552 = vmatpush1.msra.mxu0 0.0
    %553 = vmatprep.subr.mxu0 0.0
    %554 = vmatpush1.msra.mxu0 0.0
    %555 = vmatprep.subr.mxu0 0.0
    %556 = vmatpush1.msra.mxu0 0.0
    %557 = vmatprep.subr.mxu0 0.0
    %558 = vmatpush1.msra.mxu0 0.0
    %559 = vmatprep.subr.mxu0 0.0
    %v560 = vand.u32 %v100, 4294901760
    %561 = vmatpush1.msra.mxu0 %v560
    %562 = vmatprep.subr.mxu0 0.0
    %v563 = vand.u32 %v99, 4294901760
    %564 = vmatpush1.msra.mxu0 %v563
    %565 = vmatprep.subr.mxu0 0.0
    %566 = vmatpush2.msra.mxu0 0.0
    %567 = vmatprep.subr.mxu0 0.0
    %568 = vmatpush2.msra.mxu0 0.0
    %569 = vmatprep.subr.mxu0 0.0
    %570 = vmatpush2.msra.mxu0 0.0
    %571 = vmatprep.subr.mxu0 0.0
    %572 = vmatpush2.msra.mxu0 0.0
    %573 = vmatprep.subr.mxu0 0.0
    %574 = vmatpush2.msra.mxu0 0.0
    %575 = vmatprep.subr.mxu0 0.0
    %576 = vmatpush2.msra.mxu0 0.0
    %577 = vmatprep.subr.mxu0 0.0
    %578 = vmatpush2.msra.mxu0 0.0
    %579 = vmatprep.subr.mxu0 0.0
    %580 = vmatpush2.msra.mxu0 0.0
    %581 = vmatprep.subr.mxu0 0.0
    %582 = vmatpush2.msra.mxu0 0.0
    %583 = vmatprep.subr.mxu0 0.0
    %584 = vmatpush2.msra.mxu0 0.0
    %585 = vmatprep.subr.mxu0 0.0
    %586 = vmatpush2.msra.mxu0 0.0
    %587 = vmatprep.subr.mxu0 0.0
    %588 = vmatpush2.msra.mxu0 0.0
    %589 = vmatprep.subr.mxu0 0.0
    %590 = vmatpush2.msra.mxu0 0.0
    %591 = vmatprep.subr.mxu0 0.0
    %592 = vmatpush2.msra.mxu0 0.0
    %593 = vmatprep.subr.mxu0 0.0
    %594 = vmatpush2.msra.mxu0 0.0
    %595 = vmatprep.subr.mxu0 0.0
    %596 = vmatpush2.msra.mxu0 0.0
    %597 = vmatprep.mubr.f32.mxu0 0.0
    %v598 = vand.u32 %v103, 4294901760
    %599 = vmatmul.mubr.f32.gmra.mxu0 %v598
    %v600 = vpop.f32.mrf.mxu0
    %v601 = vadd.f32 %v522, %v600
    %v602 = vpop.f32.mrf.mxu0
    %603 = vmatprep.mubr.f32.mxu0 0.0
    %v604 = vand.u32 %v106, 4294901760
    %605 = vmatmul.mubr.f32.gmra.mxu0 %v604
    %v606 = vpop.f32.mrf.mxu0
    %v607 = vadd.f32 %v528, %v606
    %v608 = vpop.f32.mrf.mxu0
    %609 = vdwg.mxu0
    %v611 = vsel %vm101, %v81, 0
    %v614 = vsel %vm101, %v82, 0
    %616 = vmatprep.subr.mxu0 0.0
    %617 = vmatpush1.msra.mxu0 0.0
    %618 = vmatprep.subr.mxu0 0.0
    %619 = vmatpush1.msra.mxu0 0.0
    %620 = vmatprep.subr.mxu0 0.0
    %621 = vmatpush1.msra.mxu0 0.0
    %622 = vmatprep.subr.mxu0 0.0
    %623 = vmatpush1.msra.mxu0 0.0
    %624 = vmatprep.subr.mxu0 0.0
    %625 = vmatpush1.msra.mxu0 0.0
    %626 = vmatprep.subr.mxu0 0.0
    %627 = vmatpush1.msra.mxu0 0.0
    %628 = vmatprep.subr.mxu0 0.0
    %629 = vmatpush1.msra.mxu0 0.0
    %630 = vmatprep.subr.mxu0 0.0
    %631 = vmatpush1.msra.mxu0 0.0
    %632 = vmatprep.subr.mxu0 0.0
    %633 = vmatpush1.msra.mxu0 0.0
    %634 = vmatprep.subr.mxu0 0.0
    %635 = vmatpush1.msra.mxu0 0.0
    %636 = vmatprep.subr.mxu0 0.0
    %637 = vmatpush1.msra.mxu0 0.0
    %638 = vmatprep.subr.mxu0 0.0
    %639 = vmatpush1.msra.mxu0 0.0
    %640 = vmatprep.subr.mxu0 0.0
    %641 = vmatpush1.msra.mxu0 0.0
    %642 = vmatprep.subr.mxu0 0.0
    %643 = vmatpush1.msra.mxu0 0.0
    %644 = vmatprep.subr.mxu0 0.0
    %v645 = vand.u32 %v98, 4294901760
    %646 = vmatpush1.msra.mxu0 %v645
    %647 = vmatprep.subr.mxu0 0.0
    %v648 = vand.u32 %v97, 4294901760
    %649 = vmatpush1.msra.mxu0 %v648
    %650 = vmatprep.subr.mxu0 0.0
    %651 = vmatpush2.msra.mxu0 0.0
    %652 = vmatprep.subr.mxu0 0.0
    %653 = vmatpush2.msra.mxu0 0.0
    %654 = vmatprep.subr.mxu0 0.0
    %655 = vmatpush2.msra.mxu0 0.0
    %656 = vmatprep.subr.mxu0 0.0
    %657 = vmatpush2.msra.mxu0 0.0
    %658 = vmatprep.subr.mxu0 0.0
    %659 = vmatpush2.msra.mxu0 0.0
    %660 = vmatprep.subr.mxu0 0.0
    %661 = vmatpush2.msra.mxu0 0.0
    %662 = vmatprep.subr.mxu0 0.0
    %663 = vmatpush2.msra.mxu0 0.0
    %664 = vmatprep.subr.mxu0 0.0
    %665 = vmatpush2.msra.mxu0 0.0
    %666 = vmatprep.subr.mxu0 0.0
    %667 = vmatpush2.msra.mxu0 0.0
    %668 = vmatprep.subr.mxu0 0.0
    %669 = vmatpush2.msra.mxu0 0.0
    %670 = vmatprep.subr.mxu0 0.0
    %671 = vmatpush2.msra.mxu0 0.0
    %672 = vmatprep.subr.mxu0 0.0
    %673 = vmatpush2.msra.mxu0 0.0
    %674 = vmatprep.subr.mxu0 0.0
    %675 = vmatpush2.msra.mxu0 0.0
    %676 = vmatprep.subr.mxu0 0.0
    %677 = vmatpush2.msra.mxu0 0.0
    %678 = vmatprep.subr.mxu0 0.0
    %679 = vmatpush2.msra.mxu0 0.0
    %680 = vmatprep.subr.mxu0 0.0
    %681 = vmatpush2.msra.mxu0 0.0
    %682 = vmatprep.mubr.f32.mxu0 0.0
    %v683 = vand.u32 %v611, 4294901760
    %v684 = vsub.f32 %v611, %v683
    %v685 = vand.u32 %v684, 4294901760
    %v686 = vsub.f32 %v684, %v685
    %v687 = vand.u32 %v686, 4294901760
    %688 = vmatmul.mubr.f32.gmra.mxu0 %v687
    %v689 = vpop.f32.mrf.mxu0
    %v690 = vadd.f32 %v601, %v689
    %v691 = vpop.f32.mrf.mxu0
    %692 = vmatprep.mubr.f32.mxu0 0.0
    %v693 = vand.u32 %v614, 4294901760
    %v694 = vsub.f32 %v614, %v693
    %v695 = vand.u32 %v694, 4294901760
    %v696 = vsub.f32 %v694, %v695
    %v697 = vand.u32 %v696, 4294901760
    %698 = vmatmul.mubr.f32.gmra.mxu0 %v697
    %v699 = vpop.f32.mrf.mxu0
    %v700 = vadd.f32 %v607, %v699
    %v701 = vpop.f32.mrf.mxu0
    %702 = vdwg.mxu0
    %703 = vmatprep.subr.mxu0 0.0
    %704 = vmatpush1.msra.mxu0 0.0
    %705 = vmatprep.subr.mxu0 0.0
    %706 = vmatpush1.msra.mxu0 0.0
    %707 = vmatprep.subr.mxu0 0.0
    %708 = vmatpush1.msra.mxu0 0.0
    %709 = vmatprep.subr.mxu0 0.0
    %710 = vmatpush1.msra.mxu0 0.0
    %711 = vmatprep.subr.mxu0 0.0
    %712 = vmatpush1.msra.mxu0 0.0
    %713 = vmatprep.subr.mxu0 0.0
    %714 = vmatpush1.msra.mxu0 0.0
    %715 = vmatprep.subr.mxu0 0.0
    %716 = vmatpush1.msra.mxu0 0.0
    %717 = vmatprep.subr.mxu0 0.0
    %718 = vmatpush1.msra.mxu0 0.0
    %719 = vmatprep.subr.mxu0 0.0
    %720 = vmatpush1.msra.mxu0 0.0
    %721 = vmatprep.subr.mxu0 0.0
    %722 = vmatpush1.msra.mxu0 0.0
    %723 = vmatprep.subr.mxu0 0.0
    %724 = vmatpush1.msra.mxu0 0.0
    %725 = vmatprep.subr.mxu0 0.0
    %726 = vmatpush1.msra.mxu0 0.0
    %727 = vmatprep.subr.mxu0 0.0
    %728 = vmatpush1.msra.mxu0 0.0
    %729 = vmatprep.subr.mxu0 0.0
    %730 = vmatpush1.msra.mxu0 0.0
    %731 = vmatprep.subr.mxu0 0.0
    %v732 = vand.u32 %v98, 4294901760
    %v733 = vsub.f32 %v98, %v732
    %v734 = vand.u32 %v733, 4294901760
    %v735 = vsub.f32 %v733, %v734
    %v736 = vand.u32 %v735, 4294901760
    %737 = vmatpush1.msra.mxu0 %v736
    %738 = vmatprep.subr.mxu0 0.0
    %v739 = vand.u32 %v97, 4294901760
    %v740 = vsub.f32 %v97, %v739
    %v741 = vand.u32 %v740, 4294901760
    %v742 = vsub.f32 %v740, %v741
    %v743 = vand.u32 %v742, 4294901760
    %744 = vmatpush1.msra.mxu0 %v743
    %745 = vmatprep.subr.mxu0 0.0
    %746 = vmatpush2.msra.mxu0 0.0
    %747 = vmatprep.subr.mxu0 0.0
    %748 = vmatpush2.msra.mxu0 0.0
    %749 = vmatprep.subr.mxu0 0.0
    %750 = vmatpush2.msra.mxu0 0.0
    %751 = vmatprep.subr.mxu0 0.0
    %752 = vmatpush2.msra.mxu0 0.0
    %753 = vmatprep.subr.mxu0 0.0
    %754 = vmatpush2.msra.mxu0 0.0
    %755 = vmatprep.subr.mxu0 0.0
    %756 = vmatpush2.msra.mxu0 0.0
    %757 = vmatprep.subr.mxu0 0.0
    %758 = vmatpush2.msra.mxu0 0.0
    %759 = vmatprep.subr.mxu0 0.0
    %760 = vmatpush2.msra.mxu0 0.0
    %761 = vmatprep.subr.mxu0 0.0
    %762 = vmatpush2.msra.mxu0 0.0
    %763 = vmatprep.subr.mxu0 0.0
    %764 = vmatpush2.msra.mxu0 0.0
    %765 = vmatprep.subr.mxu0 0.0
    %766 = vmatpush2.msra.mxu0 0.0
    %767 = vmatprep.subr.mxu0 0.0
    %768 = vmatpush2.msra.mxu0 0.0
    %769 = vmatprep.subr.mxu0 0.0
    %770 = vmatpush2.msra.mxu0 0.0
    %771 = vmatprep.subr.mxu0 0.0
    %772 = vmatpush2.msra.mxu0 0.0
    %773 = vmatprep.subr.mxu0 0.0
    %774 = vmatpush2.msra.mxu0 0.0
    %775 = vmatprep.subr.mxu0 0.0
    %776 = vmatpush2.msra.mxu0 0.0
    %777 = vmatprep.mubr.f32.mxu0 0.0
    %v778 = vand.u32 %v611, 4294901760
    %779 = vmatmul.mubr.f32.gmra.mxu0 %v778
    %v780 = vpop.f32.mrf.mxu0
    %v781 = vadd.f32 %v690, %v780
    %v782 = vpop.f32.mrf.mxu0
    %783 = vmatprep.mubr.f32.mxu0 0.0
    %v784 = vand.u32 %v614, 4294901760
    %785 = vmatmul.mubr.f32.gmra.mxu0 %v784
    %v786 = vpop.f32.mrf.mxu0
    %v787 = vadd.f32 %v700, %v786
    %v788 = vpop.f32.mrf.mxu0
    %789 = vdwg.mxu0
    %790 = vmatprep.subr.mxu0 0.0
    %791 = vmatpush1.msra.mxu0 0.0
    %792 = vmatprep.subr.mxu0 0.0
    %793 = vmatpush1.msra.mxu0 0.0
    %794 = vmatprep.subr.mxu0 0.0
    %795 = vmatpush1.msra.mxu0 0.0
    %796 = vmatprep.subr.mxu0 0.0
    %797 = vmatpush1.msra.mxu0 0.0
    %798 = vmatprep.subr.mxu0 0.0
    %799 = vmatpush1.msra.mxu0 0.0
    %800 = vmatprep.subr.mxu0 0.0
    %801 = vmatpush1.msra.mxu0 0.0
    %802 = vmatprep.subr.mxu0 0.0
    %803 = vmatpush1.msra.mxu0 0.0
    %804 = vmatprep.subr.mxu0 0.0
    %805 = vmatpush1.msra.mxu0 0.0
    %806 = vmatprep.subr.mxu0 0.0
    %807 = vmatpush1.msra.mxu0 0.0
    %808 = vmatprep.subr.mxu0 0.0
    %809 = vmatpush1.msra.mxu0 0.0
    %810 = vmatprep.subr.mxu0 0.0
    %811 = vmatpush1.msra.mxu0 0.0
    %812 = vmatprep.subr.mxu0 0.0
    %813 = vmatpush1.msra.mxu0 0.0
    %814 = vmatprep.subr.mxu0 0.0
    %815 = vmatpush1.msra.mxu0 0.0
    %816 = vmatprep.subr.mxu0 0.0
    %817 = vmatpush1.msra.mxu0 0.0
    %818 = vmatprep.subr.mxu0 0.0
    %v819 = vand.u32 %v98, 4294901760
    %v820 = vsub.f32 %v98, %v819
    %821 = vmatpush1.msra.mxu0 %v820
    %822 = vmatprep.subr.mxu0 0.0
    %v823 = vand.u32 %v97, 4294901760
    %v824 = vsub.f32 %v97, %v823
    %825 = vmatpush1.msra.mxu0 %v824
    %826 = vmatprep.subr.mxu0 0.0
    %827 = vmatpush2.msra.mxu0 0.0
    %828 = vmatprep.subr.mxu0 0.0
    %829 = vmatpush2.msra.mxu0 0.0
    %830 = vmatprep.subr.mxu0 0.0
    %831 = vmatpush2.msra.mxu0 0.0
    %832 = vmatprep.subr.mxu0 0.0
    %833 = vmatpush2.msra.mxu0 0.0
    %834 = vmatprep.subr.mxu0 0.0
    %835 = vmatpush2.msra.mxu0 0.0
    %836 = vmatprep.subr.mxu0 0.0
    %837 = vmatpush2.msra.mxu0 0.0
    %838 = vmatprep.subr.mxu0 0.0
    %839 = vmatpush2.msra.mxu0 0.0
    %840 = vmatprep.subr.mxu0 0.0
    %841 = vmatpush2.msra.mxu0 0.0
    %842 = vmatprep.subr.mxu0 0.0
    %843 = vmatpush2.msra.mxu0 0.0
    %844 = vmatprep.subr.mxu0 0.0
    %845 = vmatpush2.msra.mxu0 0.0
    %846 = vmatprep.subr.mxu0 0.0
    %847 = vmatpush2.msra.mxu0 0.0
    %848 = vmatprep.subr.mxu0 0.0
    %849 = vmatpush2.msra.mxu0 0.0
    %850 = vmatprep.subr.mxu0 0.0
    %851 = vmatpush2.msra.mxu0 0.0
    %852 = vmatprep.subr.mxu0 0.0
    %853 = vmatpush2.msra.mxu0 0.0
    %854 = vmatprep.subr.mxu0 0.0
    %855 = vmatpush2.msra.mxu0 0.0
    %856 = vmatprep.subr.mxu0 0.0
    %857 = vmatpush2.msra.mxu0 0.0
    %858 = vmatprep.mubr.f32.mxu0 0.0
    %v859 = vand.u32 %v611, 4294901760
    %v860 = vsub.f32 %v611, %v859
    %861 = vmatmul.mubr.f32.gmra.mxu0 %v860
    %v862 = vpop.f32.mrf.mxu0
    %v863 = vadd.f32 %v781, %v862
    %v864 = vpop.f32.mrf.mxu0
    %865 = vmatprep.mubr.f32.mxu0 0.0
    %v866 = vand.u32 %v614, 4294901760
    %v867 = vsub.f32 %v614, %v866
    %868 = vmatmul.mubr.f32.gmra.mxu0 %v867
    %v869 = vpop.f32.mrf.mxu0
    %v870 = vadd.f32 %v787, %v869
    %v871 = vpop.f32.mrf.mxu0
    %872 = vdwg.mxu0
    %873 = vmatprep.subr.mxu0 0.0
    %874 = vmatpush1.msra.mxu0 0.0
    %875 = vmatprep.subr.mxu0 0.0
    %876 = vmatpush1.msra.mxu0 0.0
    %877 = vmatprep.subr.mxu0 0.0
    %878 = vmatpush1.msra.mxu0 0.0
    %879 = vmatprep.subr.mxu0 0.0
    %880 = vmatpush1.msra.mxu0 0.0
    %881 = vmatprep.subr.mxu0 0.0
    %882 = vmatpush1.msra.mxu0 0.0
    %883 = vmatprep.subr.mxu0 0.0
    %884 = vmatpush1.msra.mxu0 0.0
    %885 = vmatprep.subr.mxu0 0.0
    %886 = vmatpush1.msra.mxu0 0.0
    %887 = vmatprep.subr.mxu0 0.0
    %888 = vmatpush1.msra.mxu0 0.0
    %889 = vmatprep.subr.mxu0 0.0
    %890 = vmatpush1.msra.mxu0 0.0
    %891 = vmatprep.subr.mxu0 0.0
    %892 = vmatpush1.msra.mxu0 0.0
    %893 = vmatprep.subr.mxu0 0.0
    %894 = vmatpush1.msra.mxu0 0.0
    %895 = vmatprep.subr.mxu0 0.0
    %896 = vmatpush1.msra.mxu0 0.0
    %897 = vmatprep.subr.mxu0 0.0
    %898 = vmatpush1.msra.mxu0 0.0
    %899 = vmatprep.subr.mxu0 0.0
    %900 = vmatpush1.msra.mxu0 0.0
    %901 = vmatprep.subr.mxu0 0.0
    %v902 = vand.u32 %v98, 4294901760
    %903 = vmatpush1.msra.mxu0 %v902
    %904 = vmatprep.subr.mxu0 0.0
    %v905 = vand.u32 %v97, 4294901760
    %906 = vmatpush1.msra.mxu0 %v905
    %907 = vmatprep.subr.mxu0 0.0
    %908 = vmatpush2.msra.mxu0 0.0
    %909 = vmatprep.subr.mxu0 0.0
    %910 = vmatpush2.msra.mxu0 0.0
    %911 = vmatprep.subr.mxu0 0.0
    %912 = vmatpush2.msra.mxu0 0.0
    %913 = vmatprep.subr.mxu0 0.0
    %914 = vmatpush2.msra.mxu0 0.0
    %915 = vmatprep.subr.mxu0 0.0
    %916 = vmatpush2.msra.mxu0 0.0
    %917 = vmatprep.subr.mxu0 0.0
    %918 = vmatpush2.msra.mxu0 0.0
    %919 = vmatprep.subr.mxu0 0.0
    %920 = vmatpush2.msra.mxu0 0.0
    %921 = vmatprep.subr.mxu0 0.0
    %922 = vmatpush2.msra.mxu0 0.0
    %923 = vmatprep.subr.mxu0 0.0
    %924 = vmatpush2.msra.mxu0 0.0
    %925 = vmatprep.subr.mxu0 0.0
    %926 = vmatpush2.msra.mxu0 0.0
    %927 = vmatprep.subr.mxu0 0.0
    %928 = vmatpush2.msra.mxu0 0.0
    %929 = vmatprep.subr.mxu0 0.0
    %930 = vmatpush2.msra.mxu0 0.0
    %931 = vmatprep.subr.mxu0 0.0
    %932 = vmatpush2.msra.mxu0 0.0
    %933 = vmatprep.subr.mxu0 0.0
    %934 = vmatpush2.msra.mxu0 0.0
    %935 = vmatprep.subr.mxu0 0.0
    %936 = vmatpush2.msra.mxu0 0.0
    %937 = vmatprep.subr.mxu0 0.0
    %938 = vmatpush2.msra.mxu0 0.0
    %939 = vmatprep.mubr.f32.mxu0 0.0
    %v940 = vand.u32 %v611, 4294901760
    %v941 = vsub.f32 %v611, %v940
    %v942 = vand.u32 %v941, 4294901760
    %943 = vmatmul.mubr.f32.gmra.mxu0 %v942
    %v944 = vpop.f32.mrf.mxu0
    %v945 = vadd.f32 %v863, %v944
    %v946 = vpop.f32.mrf.mxu0
    %947 = vmatprep.mubr.f32.mxu0 0.0
    %v948 = vand.u32 %v614, 4294901760
    %v949 = vsub.f32 %v614, %v948
    %v950 = vand.u32 %v949, 4294901760
    %951 = vmatmul.mubr.f32.gmra.mxu0 %v950
    %v952 = vpop.f32.mrf.mxu0
    %v953 = vadd.f32 %v870, %v952
    %v954 = vpop.f32.mrf.mxu0
    %955 = vdwg.mxu0
    %956 = vmatprep.subr.mxu0 0.0
    %957 = vmatpush1.msra.mxu0 0.0
    %958 = vmatprep.subr.mxu0 0.0
    %959 = vmatpush1.msra.mxu0 0.0
    %960 = vmatprep.subr.mxu0 0.0
    %961 = vmatpush1.msra.mxu0 0.0
    %962 = vmatprep.subr.mxu0 0.0
    %963 = vmatpush1.msra.mxu0 0.0
    %964 = vmatprep.subr.mxu0 0.0
    %965 = vmatpush1.msra.mxu0 0.0
    %966 = vmatprep.subr.mxu0 0.0
    %967 = vmatpush1.msra.mxu0 0.0
    %968 = vmatprep.subr.mxu0 0.0
    %969 = vmatpush1.msra.mxu0 0.0
    %970 = vmatprep.subr.mxu0 0.0
    %971 = vmatpush1.msra.mxu0 0.0
    %972 = vmatprep.subr.mxu0 0.0
    %973 = vmatpush1.msra.mxu0 0.0
    %974 = vmatprep.subr.mxu0 0.0
    %975 = vmatpush1.msra.mxu0 0.0
    %976 = vmatprep.subr.mxu0 0.0
    %977 = vmatpush1.msra.mxu0 0.0
    %978 = vmatprep.subr.mxu0 0.0
    %979 = vmatpush1.msra.mxu0 0.0
    %980 = vmatprep.subr.mxu0 0.0
    %981 = vmatpush1.msra.mxu0 0.0
    %982 = vmatprep.subr.mxu0 0.0
    %983 = vmatpush1.msra.mxu0 0.0
    %984 = vmatprep.subr.mxu0 0.0
    %v985 = vand.u32 %v98, 4294901760
    %v986 = vsub.f32 %v98, %v985
    %v987 = vand.u32 %v986, 4294901760
    %988 = vmatpush1.msra.mxu0 %v987
    %989 = vmatprep.subr.mxu0 0.0
    %v990 = vand.u32 %v97, 4294901760
    %v991 = vsub.f32 %v97, %v990
    %v992 = vand.u32 %v991, 4294901760
    %993 = vmatpush1.msra.mxu0 %v992
    %994 = vmatprep.subr.mxu0 0.0
    %995 = vmatpush2.msra.mxu0 0.0
    %996 = vmatprep.subr.mxu0 0.0
    %997 = vmatpush2.msra.mxu0 0.0
    %998 = vmatprep.subr.mxu0 0.0
    %999 = vmatpush2.msra.mxu0 0.0
    %1000 = vmatprep.subr.mxu0 0.0
    %1001 = vmatpush2.msra.mxu0 0.0
    %1002 = vmatprep.subr.mxu0 0.0
    %1003 = vmatpush2.msra.mxu0 0.0
    %1004 = vmatprep.subr.mxu0 0.0
    %1005 = vmatpush2.msra.mxu0 0.0
    %1006 = vmatprep.subr.mxu0 0.0
    %1007 = vmatpush2.msra.mxu0 0.0
    %1008 = vmatprep.subr.mxu0 0.0
    %1009 = vmatpush2.msra.mxu0 0.0
    %1010 = vmatprep.subr.mxu0 0.0
    %1011 = vmatpush2.msra.mxu0 0.0
    %1012 = vmatprep.subr.mxu0 0.0
    %1013 = vmatpush2.msra.mxu0 0.0
    %1014 = vmatprep.subr.mxu0 0.0
    %1015 = vmatpush2.msra.mxu0 0.0
    %1016 = vmatprep.subr.mxu0 0.0
    %1017 = vmatpush2.msra.mxu0 0.0
    %1018 = vmatprep.subr.mxu0 0.0
    %1019 = vmatpush2.msra.mxu0 0.0
    %1020 = vmatprep.subr.mxu0 0.0
    %1021 = vmatpush2.msra.mxu0 0.0
    %1022 = vmatprep.subr.mxu0 0.0
    %1023 = vmatpush2.msra.mxu0 0.0
    %1024 = vmatprep.subr.mxu0 0.0
    %1025 = vmatpush2.msra.mxu0 0.0
    %1026 = vmatprep.mubr.f32.mxu0 0.0
    %v1027 = vand.u32 %v611, 4294901760
    %1028 = vmatmul.mubr.f32.gmra.mxu0 %v1027
    %v1029 = vpop.f32.mrf.mxu0
    %v1030 = vadd.f32 %v945, %v1029
    %v1031 = vpop.f32.mrf.mxu0
    %1032 = vmatprep.mubr.f32.mxu0 0.0
    %v1033 = vand.u32 %v614, 4294901760
    %1034 = vmatmul.mubr.f32.gmra.mxu0 %v1033
    %v1035 = vpop.f32.mrf.mxu0
    %v1036 = vadd.f32 %v953, %v1035
    %v1037 = vpop.f32.mrf.mxu0
    %1038 = vdwg.mxu0
    %1039 = vmatprep.subr.mxu0 0.0
    %1040 = vmatpush1.msra.mxu0 0.0
    %1041 = vmatprep.subr.mxu0 0.0
    %1042 = vmatpush1.msra.mxu0 0.0
    %1043 = vmatprep.subr.mxu0 0.0
    %1044 = vmatpush1.msra.mxu0 0.0
    %1045 = vmatprep.subr.mxu0 0.0
    %1046 = vmatpush1.msra.mxu0 0.0
    %1047 = vmatprep.subr.mxu0 0.0
    %1048 = vmatpush1.msra.mxu0 0.0
    %1049 = vmatprep.subr.mxu0 0.0
    %1050 = vmatpush1.msra.mxu0 0.0
    %1051 = vmatprep.subr.mxu0 0.0
    %1052 = vmatpush1.msra.mxu0 0.0
    %1053 = vmatprep.subr.mxu0 0.0
    %1054 = vmatpush1.msra.mxu0 0.0
    %1055 = vmatprep.subr.mxu0 0.0
    %1056 = vmatpush1.msra.mxu0 0.0
    %1057 = vmatprep.subr.mxu0 0.0
    %1058 = vmatpush1.msra.mxu0 0.0
    %1059 = vmatprep.subr.mxu0 0.0
    %1060 = vmatpush1.msra.mxu0 0.0
    %1061 = vmatprep.subr.mxu0 0.0
    %1062 = vmatpush1.msra.mxu0 0.0
    %1063 = vmatprep.subr.mxu0 0.0
    %1064 = vmatpush1.msra.mxu0 0.0
    %1065 = vmatprep.subr.mxu0 0.0
    %1066 = vmatpush1.msra.mxu0 0.0
    %1067 = vmatprep.subr.mxu0 0.0
    %v1068 = vand.u32 %v98, 4294901760
    %1069 = vmatpush1.msra.mxu0 %v1068
    %1070 = vmatprep.subr.mxu0 0.0
    %v1071 = vand.u32 %v97, 4294901760
    %1072 = vmatpush1.msra.mxu0 %v1071
    %1073 = vmatprep.subr.mxu0 0.0
    %1074 = vmatpush2.msra.mxu0 0.0
    %1075 = vmatprep.subr.mxu0 0.0
    %1076 = vmatpush2.msra.mxu0 0.0
    %1077 = vmatprep.subr.mxu0 0.0
    %1078 = vmatpush2.msra.mxu0 0.0
    %1079 = vmatprep.subr.mxu0 0.0
    %1080 = vmatpush2.msra.mxu0 0.0
    %1081 = vmatprep.subr.mxu0 0.0
    %1082 = vmatpush2.msra.mxu0 0.0
    %1083 = vmatprep.subr.mxu0 0.0
    %1084 = vmatpush2.msra.mxu0 0.0
    %1085 = vmatprep.subr.mxu0 0.0
    %1086 = vmatpush2.msra.mxu0 0.0
    %1087 = vmatprep.subr.mxu0 0.0
    %1088 = vmatpush2.msra.mxu0 0.0
    %1089 = vmatprep.subr.mxu0 0.0
    %1090 = vmatpush2.msra.mxu0 0.0
    %1091 = vmatprep.subr.mxu0 0.0
    %1092 = vmatpush2.msra.mxu0 0.0
    %1093 = vmatprep.subr.mxu0 0.0
    %1094 = vmatpush2.msra.mxu0 0.0
    %1095 = vmatprep.subr.mxu0 0.0
    %1096 = vmatpush2.msra.mxu0 0.0
    %1097 = vmatprep.subr.mxu0 0.0
    %1098 = vmatpush2.msra.mxu0 0.0
    %1099 = vmatprep.subr.mxu0 0.0
    %1100 = vmatpush2.msra.mxu0 0.0
    %1101 = vmatprep.subr.mxu0 0.0
    %1102 = vmatpush2.msra.mxu0 0.0
    %1103 = vmatprep.subr.mxu0 0.0
    %1104 = vmatpush2.msra.mxu0 0.0
    %1105 = vmatprep.mubr.f32.mxu0 0.0
    %v1106 = vand.u32 %v611, 4294901760
    %1107 = vmatmul.mubr.f32.gmra.mxu0 %v1106
    %v1108 = vpop.f32.mrf.mxu0
    %v1109 = vadd.f32 %v1030, %v1108
    %v1110 = vpop.f32.mrf.mxu0
    %1111 = vmatprep.mubr.f32.mxu0 0.0
    %v1112 = vand.u32 %v614, 4294901760
    %1113 = vmatmul.mubr.f32.gmra.mxu0 %v1112
    %v1114 = vpop.f32.mrf.mxu0
    %v1115 = vadd.f32 %v1036, %v1114
    %v1116 = vpop.f32.mrf.mxu0
    %1117 = vdwg.mxu0
    %v1118 = vld [vmem:[%s4] sm:$0x1]
    %v1119 = vmul.f32 %v1109, 1.442695
    %v1120 = vpow.pop %v1119
    %v1121 = vmul.f32 %v1115, 1.442695
    %v1122 = vpow.pop %v1121
    %v1124 = vlaneseq
    %v1125 = vshrl.u32 %v1124, 7
    %v1126 = vsub.s32 0, %v1125
    %v1127 = vrot.slane %v1118, %v1126
    %v1129 = vmul.f32 %v1127, %v1120
    %v1130 = vmul.f32 %v1127, %v1122
    %1131 = vst [vmem:[#allocation9] sm:$0xff] %v1129
    %1132 = vst [vmem:[#allocation9 + $0x8] sm:$0xff] %v1130
    // Predicated region
    $region34: #{tpu_custom_call.1} parent=1 // pred_check
      _
    $region35: #{tpu_custom_call.1} parent=1 // pred_check_branch
      %1134 = sbr.rel (0) target = $region37
    $region36: #{tpu_custom_call.1} parent=1 // pred_region
      %s1136 = ssub.s32 256, 256
      %1137 = vsyncadd [#allocation5], %s1136
      %s1138 = sshll.u32 [#allocation9], 4
      %s1139 = int_to_ptr.vmem [resolvable:$true] %s1138
      %1144 = dma.vmem_to_hbm [thread:$0]  %s1139, 256, %s5, [#allocation5], 128, 128, 8
    $region37: #{tpu_custom_call.1} parent=1 // pred_fallthru
      _
    // Predicated region
    $region38: #{tpu_custom_call.1} parent=1 // pred_check
      _
    $region39: #{tpu_custom_call.1} parent=1 // pred_check_branch
      %1146 = sbr.rel (0) target = $region41
    $region40: #{tpu_custom_call.1} parent=1 // pred_region
      %1147 = dma.done [#allocation5], 256
    $region41: #{tpu_custom_call.1} parent=1 // pred_fallthru
      _
    %1148 = vsyncpa [#allocation4], 1
    %1149 = vsyncpa [#allocation7], 1
    %1150 = vsyncpa [#allocation5], 1

</llo_original>
